<compile_context>
chip_gen: v6e
topology: v6e:2x2x1
jax: 0.10.0
libtpu: 0.0.40
codegen_flags: <defaults>
</compile_context>

<pallas_src>
import functools

import numpy as np
import jax
import jax.numpy as jnp
from jax import lax
from jax.experimental import pallas as pl
from jax.experimental.pallas import tpu as pltpu

C_PAD = 8  # channel rows padded to one full sublane tile


def _cdiv(a, b):
    return -(-a // b)


def _jagged_texture_kernel(sb_ref, st_ref, sf_ref, q_ref, tex_ref, out_ref,
                           *, use_bf16):
    s = pl.program_id(0)          # flattened (block, window-step) index
    t_tile = tex_ref.shape[1]

    @pl.when(sf_ref[s] == 1)      # first step of this query block
    def _init():
        out_ref[...] = jnp.zeros_like(out_ref)

    q = q_ref[...]                                   # [8, tile_n] i32 (fused)
    uv = pltpu.bitcast(q[0:2, :], jnp.float32)       # rows 0,1: u,v bits
    u = jnp.clip(uv[0:1, :], 0.0, 1.0)               # torch.clamp(x, 0, 1)
    v = jnp.clip(uv[1:2, :], 0.0, 1.0)
    h = q[2:3, :]                                    # [1, tile_n] i32
    w = q[3:4, :]
    off = q[4:5, :]

    rf = u * h.astype(jnp.float32)                   # row coord in [0, h]
    cf = v * w.astype(jnp.float32)                   # col coord in [0, w]
    r0 = jnp.clip(jnp.floor(rf).astype(jnp.int32), 0, h - 1)
    c0 = jnp.clip(jnp.floor(cf).astype(jnp.int32), 0, w - 1)
    r1 = jnp.minimum(r0 + 1, h - 1)
    c1 = jnp.minimum(c0 + 1, w - 1)
    fr = jnp.clip(rf - r0.astype(jnp.float32), 0.0, 1.0)
    fc = jnp.clip(cf - c0.astype(jnp.float32), 0.0, 1.0)

    # Texel indices local to this step's t_tile-wide texture window.
    win_start = st_ref[s] * t_tile
    base = off - win_start
    i00 = base + r0 * w + c0
    i01 = base + r0 * w + c1
    i10 = base + r1 * w + c0
    i11 = base + r1 * w + c1

    w00 = (1.0 - fr) * (1.0 - fc)
    w01 = (1.0 - fr) * fc
    w10 = fr * (1.0 - fc)
    w11 = fr * fc

    # One-hot scatter of the 4 bilinear taps over the current window only
    # (out-of-window taps never match -> contribute 0); iota is a single
    # [t_tile, 1] column that broadcasts against the [1, tile_n] tap indices.
    row = lax.broadcasted_iota(jnp.int32, (t_tile, 1), 0)
    weights = (jnp.where(row == i00, w00, 0.0)
               + jnp.where(row == i01, w01, 0.0)
               + jnp.where(row == i10, w10, 0.0)
               + jnp.where(row == i11, w11, 0.0))

    tex = tex_ref[...]
    if use_bf16:  # v6e/v7x fast path; ~1e-3 rel error, keep f32 accumulation.
        tex = tex.astype(jnp.bfloat16)
        weights = weights.astype(jnp.bfloat16)
    # [C_PAD, t_tile] @ [t_tile, tile_n] -> [C_PAD, tile_n], lane-dense.
    out_ref[...] += jnp.dot(tex, weights, preferred_element_type=jnp.float32)


def pack_texture(texture, *, t_tile=128):
    """One-time repack of the jagged texture into lane-dense [C_PAD, T_pad].

    Do this once per parameter update, outside the per-call hot path.  The
    channel dim is padded to 8 sublanes so the in-kernel accumulate/store of
    the output block is full-width.
    """
    t, c = texture.shape
    t_pad = _cdiv(t, t_tile) * t_tile
    tex_t = jnp.zeros((C_PAD, t_pad), jnp.float32)
    return tex_t.at[:c, :t].set(texture.astype(jnp.float32).T)


def make_plan(query_dims, total_texels, *, t_tile=128, tile_n=256):
    """Precompute everything that only depends on query_dims (cache across calls).

    Sorts queries by patch offset, pads to a block multiple, computes the
    per-block texture-tile window and flattens all real (block, window-step)
    pairs CSR-style into scalar-prefetch arrays.  All host work / syncs happen
    here, never in the per-call forward.
    """
    dims = np.asarray(jax.device_get(query_dims)).astype(np.int32)
    n = dims.shape[0]
    perm = np.argsort(dims[:, 2], kind="stable").astype(np.int32)
    inv_perm = np.empty(n, np.int32)
    inv_perm[perm] = np.arange(n, dtype=np.int32)

    n_pad = _cdiv(n, tile_n) * tile_n
    perm_pad = np.concatenate([perm, np.full(n_pad - n, perm[-1], np.int32)])
    dims_s = dims[perm_pad]                          # [n_pad, 3] sorted + padded

    num_blocks = n_pad // tile_n
    num_t_blocks = max(_cdiv(int(total_texels), t_tile), 1)

    off_b = dims_s[:, 2].reshape(num_blocks, tile_n)
    hw_b = (dims_s[:, 0] * dims_s[:, 1]).reshape(num_blocks, tile_n)
    lo_texel = off_b.min(axis=1)
    hi_texel = np.maximum((off_b + hw_b).max(axis=1), lo_texel + 1)
    lo = np.clip(lo_texel // t_tile, 0, num_t_blocks - 1)
    hi = np.clip((hi_texel - 1) // t_tile, 0, num_t_blocks - 1)
    cnt = np.maximum(hi - lo + 1, 1)

    # CSR flattening of (block, window-step) pairs -> 1-D grid, no wasted steps.
    total_steps = int(cnt.sum())
    starts = np.cumsum(cnt) - cnt
    step_block = np.repeat(np.arange(num_blocks, dtype=np.int32), cnt).astype(np.int32)
    step_k = (np.arange(total_steps, dtype=np.int32) - starts[step_block]).astype(np.int32)
    step_tblk = (lo[step_block] + step_k).astype(np.int32)
    step_first = (step_k == 0).astype(np.int32)

    # Fused query block skeleton: rows 2..4 hold (h, w, offset); rows 0..1 get
    # the per-call uv bits.  One lane-oriented DMA stream per query block.
    q_base = np.zeros((8, n_pad), np.int32)
    q_base[2:5, :] = dims_s.T

    return dict(
        n=n, n_pad=n_pad, t_tile=t_tile, tile_n=tile_n, num_steps=total_steps,
        perm_pad=jnp.asarray(perm_pad),
        inv_perm=jnp.asarray(inv_perm),
        q_base=jnp.asarray(q_base),
        step_block=jnp.asarray(step_block),
        step_tblk=jnp.asarray(step_tblk),
        step_first=jnp.asarray(step_first),
    )


def jagged_texture_forward(x, plan, tex_t, *, out_dim, use_bf16=False):
    """Pallas forward for JaggedTexture.forward(x, query_dims).

    x       : [N, 2] float  uv queries
    plan    : output of make_plan(query_dims, total_texels, ...)
    tex_t   : [C_PAD, T_pad] output of pack_texture (same t_tile as the plan)
    """
    c_pad, t_pad = tex_t.shape
    t_tile, tile_n = plan["t_tile"], plan["tile_n"]
    n_pad = plan["n_pad"]
    assert c_pad == C_PAD and t_pad % t_tile == 0

    # Per-call work: gather uv by the cached sorted+padded permutation and
    # bit-pack into rows 0-1 of the cached fused query block.
    uv_s = x.astype(jnp.float32)[plan["perm_pad"]]                 # [n_pad, 2]
    q = plan["q_base"].at[0:2, :].set(
        lax.bitcast_convert_type(uv_s, jnp.int32).T)

    kernel = functools.partial(_jagged_texture_kernel, use_bf16=use_bf16)
    out_t = pl.pallas_call(
        kernel,
        out_shape=jax.ShapeDtypeStruct((C_PAD, n_pad), jnp.float32),
        grid_spec=pltpu.PrefetchScalarGridSpec(
            num_scalar_prefetch=3,
            grid=(plan["num_steps"],),
            in_specs=[
                # fused query block: same block across a block's window steps
                # -> no re-DMA per step.
                pl.BlockSpec((8, tile_n), lambda s, sb, st, sf: (0, sb[s])),
                # texture tile for this step (CSR -> every step is real work).
                pl.BlockSpec((C_PAD, t_tile), lambda s, sb, st, sf: (0, st[s])),
            ],
            out_specs=pl.BlockSpec((C_PAD, tile_n),
                                   lambda s, sb, st, sf: (0, sb[s])),
        ),
        compiler_params=pltpu.CompilerParams(
            dimension_semantics=("arbitrary",)),
    )(plan["step_block"], plan["step_tblk"], plan["step_first"], q, tex_t)

    # Single inverse-permutation gather back to original query order.
    return jnp.take(out_t[:out_dim, :], plan["inv_perm"], axis=1).T


# ----------------------- plain-JAX reference (gather path) -----------------------
def ref_forward(x, query_dims, texture):
    uv = jnp.clip(x.astype(jnp.float32), 0.0, 1.0)
    h = query_dims[:, 0].astype(jnp.int32)
    w = query_dims[:, 1].astype(jnp.int32)
    off = query_dims[:, 2].astype(jnp.int32)
    rf = uv[:, 0] * h.astype(jnp.float32)
    cf = uv[:, 1] * w.astype(jnp.float32)
    r0 = jnp.clip(jnp.floor(rf).astype(jnp.int32), 0, h - 1)
    c0 = jnp.clip(jnp.floor(cf).astype(jnp.int32), 0, w - 1)
    r1 = jnp.minimum(r0 + 1, h - 1)
    c1 = jnp.minimum(c0 + 1, w - 1)
    fr = jnp.clip(rf - r0.astype(jnp.float32), 0.0, 1.0)[:, None]
    fc = jnp.clip(cf - c0.astype(jnp.float32), 0.0, 1.0)[:, None]
    i00 = off + r0 * w + c0
    i01 = off + r0 * w + c1
    i10 = off + r1 * w + c0
    i11 = off + r1 * w + c1
    return ((1 - fr) * (1 - fc) * texture[i00]
            + (1 - fr) * fc * texture[i01]
            + fr * (1 - fc) * texture[i10]
            + fr * fc * texture[i11])


def texture_dims_to_query(texture_dims):
    # JAX port of the provided helper (used only to build round-trip test data).
    idxs = jnp.arange(texture_dims.shape[0], dtype=jnp.int32)
    hws = texture_dims[:, 0] * texture_dims[:, 1]
    ids = jnp.repeat(idxs, hws)
    qd = texture_dims[ids, :]
    total = int(jnp.sum(hws))
    local = jnp.arange(total, dtype=jnp.int32) - qd[:, 2]
    uu = (local // qd[:, 1]).astype(jnp.float32) / qd[:, 0].astype(jnp.float32)
    vv = (local % qd[:, 1]).astype(jnp.float32) / qd[:, 1].astype(jnp.float32)
    return ids, jnp.stack([uu, vv], axis=-1)


if __name__ == "__main__":
    key = jax.random.PRNGKey(0)
    k_tex, k_ids, k_uv = jax.random.split(key, 3)

    # texture_dims rows: (h, w, offset); jagged patches that straddle 128-texel
    # tile boundaries so the windowed CSR path is exercised.
    hw = jnp.array([[8, 8], [4, 16], [16, 4], [12, 12], [6, 6], [10, 3]],
                   jnp.int32)
    hws = hw[:, 0] * hw[:, 1]
    offsets = jnp.cumsum(hws) - hws
    texture_dims = jnp.concatenate([hw, offsets[:, None]], axis=1)   # [6, 3]
    total_size = int(jnp.sum(hws))                                   # 402

    out_dim = 3
    # Module initializes the texture parameter to zeros; use deterministic random
    # values here so the numeric check is meaningful.
    texture = jax.random.normal(k_tex, (total_size, out_dim), jnp.float32)

    # Queries: random patch per query, uv slightly outside [0,1] to exercise clamp.
    n_queries = 300
    ids = jax.random.randint(k_ids, (n_queries,), 0, texture_dims.shape[0])
    query_dims = texture_dims[ids]                                   # [N, 3]
    x = jax.random.uniform(k_uv, (n_queries, 2), jnp.float32, -0.1, 1.1)

    ref = ref_forward(x, query_dims, texture)

    # Small tiles: exercises multi-block + multi-window CSR accumulation.
    tex128 = pack_texture(texture, t_tile=128)
    plan_s = make_plan(query_dims, total_size, t_tile=128, tile_n=128)
    out = jax.block_until_ready(
        jagged_texture_forward(x, plan_s, tex128, out_dim=out_dim))
    assert out.shape == (n_queries, out_dim)
    assert jnp.allclose(out, ref, atol=1e-5, rtol=1e-5), "mismatch (128/128)"

    # Default tiles (t_tile=128, tile_n=256).
    plan_d = make_plan(query_dims, total_size)
    out2 = jax.block_until_ready(
        jagged_texture_forward(x, plan_d, tex128, out_dim=out_dim))
    assert jnp.allclose(out2, ref, atol=1e-5, rtol=1e-5), "mismatch (128/256)"

    # Round-trip: sampling at texture_dims_to_query uvs reproduces the texels.
    rt_ids, rt_uv = texture_dims_to_query(texture_dims)
    plan_rt = make_plan(texture_dims[rt_ids], total_size, t_tile=128, tile_n=128)
    rt_out = jax.block_until_ready(
        jagged_texture_forward(rt_uv, plan_rt, tex128, out_dim=out_dim))
    assert jnp.allclose(rt_out, texture, atol=1e-5, rtol=1e-5), "round-trip failed"

    print("KERNEL_OK")
</pallas_src>

<mosaic_0001>
module attributes {stable_mosaic.version = 11 : i64} {
  func.func @_jagged_texture_kernel(%arg0: i32, %arg1: memref<7xi32, #tpu.memory_space<smem>>, %arg2: memref<7xi32, #tpu.memory_space<smem>>, %arg3: memref<7xi32, #tpu.memory_space<smem>>, %arg4: memref<8x128xi32, #tpu.memory_space<vmem>>, %arg5: memref<8x128xf32, #tpu.memory_space<vmem>>, %arg6: memref<8x128xf32, #tpu.memory_space<vmem>>) attributes {dimension_semantics = [#tpu.dimension_semantics<arbitrary>], iteration_bounds = array<i64: 7>, scalar_prefetch = 3 : i64, scratch_operands = 0 : i64, tpu.core_type = #tpu.core_type<tc>, window_params = [{transform_indices = @transform_0, window_bounds = array<i64: 8, 128>}, {transform_indices = @transform_1, window_bounds = array<i64: 8, 128>}, {transform_indices = @transform_2, window_bounds = array<i64: 8, 128>}]} {
    %0 = arith.index_cast %arg0 : i32 to index
    %1 = memref.load %arg3[%0] : memref<7xi32, #tpu.memory_space<smem>>
    %c1_i32 = arith.constant 1 : i32
    %2 = arith.cmpi eq, %1, %c1_i32 : i32
    %3 = arith.extui %2 : i1 to i32
    %c0_i32 = arith.constant 0 : i32
    %4 = arith.cmpi ne, %3, %c0_i32 : i32
    scf.if %4 {
      %cst_31 = arith.constant 0.000000e+00 : f32
      %127 = vector.broadcast %cst_31 : f32 to vector<8x128xf32>
      %c0_32 = arith.constant 0 : index
      %c0_33 = arith.constant 0 : index
      %128 = vector.load %arg6[%c0_32, %c0_33] : memref<8x128xf32, #tpu.memory_space<vmem>>, vector<8x128xf32>
      tpu.vector_store %arg6[%c0_32, %c0_33], %127 {strides = array<i32>} : memref<8x128xf32, #tpu.memory_space<vmem>>, vector<8x128xf32>,
    } else {
    }
    %c0 = arith.constant 0 : index
    %c0_0 = arith.constant 0 : index
    %5 = vector.load %arg4[%c0, %c0_0] : memref<8x128xi32, #tpu.memory_space<vmem>>, vector<8x128xi32>
    %6 = vector.extract_strided_slice %5 {offsets = [0, 0], sizes = [2, 128], strides = [1, 1]} : vector<8x128xi32> to vector<2x128xi32>
    %7 = tpu.bitcast %6 : vector<2x128xi32> -> vector<2x128xf32>
    %8 = vector.extract_strided_slice %7 {offsets = [0, 0], sizes = [1, 128], strides = [1, 1]} : vector<2x128xf32> to vector<1x128xf32>
    %cst = arith.constant 0.000000e+00 : f32
    %cst_1 = arith.constant 1.000000e+00 : f32
    %9 = vector.broadcast %cst : f32 to vector<1x128xf32>
    %10 = arith.maximumf %9, %8 : vector<1x128xf32>
    %11 = vector.broadcast %cst_1 : f32 to vector<1x128xf32>
    %12 = arith.minimumf %11, %10 : vector<1x128xf32>
    %13 = vector.extract_strided_slice %7 {offsets = [1, 0], sizes = [1, 128], strides = [1, 1]} : vector<2x128xf32> to vector<1x128xf32>
    %cst_2 = arith.constant 0.000000e+00 : f32
    %cst_3 = arith.constant 1.000000e+00 : f32
    %14 = vector.broadcast %cst_2 : f32 to vector<1x128xf32>
    %15 = arith.maximumf %14, %13 : vector<1x128xf32>
    %16 = vector.broadcast %cst_3 : f32 to vector<1x128xf32>
    %17 = arith.minimumf %16, %15 : vector<1x128xf32>
    %18 = vector.extract_strided_slice %5 {offsets = [2, 0], sizes = [1, 128], strides = [1, 1]} : vector<8x128xi32> to vector<1x128xi32>
    %19 = vector.extract_strided_slice %5 {offsets = [3, 0], sizes = [1, 128], strides = [1, 1]} : vector<8x128xi32> to vector<1x128xi32>
    %20 = vector.extract_strided_slice %5 {offsets = [4, 0], sizes = [1, 128], strides = [1, 1]} : vector<8x128xi32> to vector<1x128xi32>
    %21 = arith.sitofp %18 : vector<1x128xi32> to vector<1x128xf32>
    %22 = arith.mulf %12, %21 : vector<1x128xf32>
    %23 = arith.sitofp %19 : vector<1x128xi32> to vector<1x128xf32>
    %24 = arith.mulf %17, %23 : vector<1x128xf32>
    %25 = math.floor %22 : vector<1x128xf32>
    %26 = arith.fptosi %25 : vector<1x128xf32> to vector<1x128xi32>
    %c1_i32_4 = arith.constant 1 : i32
    %27 = vector.broadcast %c1_i32_4 : i32 to vector<1x128xi32>
    %28 = arith.subi %18, %27 : vector<1x128xi32>
    %c0_i32_5 = arith.constant 0 : i32
    %29 = vector.broadcast %c0_i32_5 : i32 to vector<1x128xi32>
    %30 = arith.maxsi %29, %26 : vector<1x128xi32>
    %31 = arith.minsi %28, %30 : vector<1x128xi32>
    %32 = math.floor %24 : vector<1x128xf32>
    %33 = arith.fptosi %32 : vector<1x128xf32> to vector<1x128xi32>
    %c1_i32_6 = arith.constant 1 : i32
    %34 = vector.broadcast %c1_i32_6 : i32 to vector<1x128xi32>
    %35 = arith.subi %19, %34 : vector<1x128xi32>
    %c0_i32_7 = arith.constant 0 : i32
    %36 = vector.broadcast %c0_i32_7 : i32 to vector<1x128xi32>
    %37 = arith.maxsi %36, %33 : vector<1x128xi32>
    %38 = arith.minsi %35, %37 : vector<1x128xi32>
    %c1_i32_8 = arith.constant 1 : i32
    %39 = vector.broadcast %c1_i32_8 : i32 to vector<1x128xi32>
    %40 = arith.addi %31, %39 : vector<1x128xi32>
    %c1_i32_9 = arith.constant 1 : i32
    %41 = vector.broadcast %c1_i32_9 : i32 to vector<1x128xi32>
    %42 = arith.subi %18, %41 : vector<1x128xi32>
    %43 = arith.minsi %40, %42 : vector<1x128xi32>
    %c1_i32_10 = arith.constant 1 : i32
    %44 = vector.broadcast %c1_i32_10 : i32 to vector<1x128xi32>
    %45 = arith.addi %38, %44 : vector<1x128xi32>
    %c1_i32_11 = arith.constant 1 : i32
    %46 = vector.broadcast %c1_i32_11 : i32 to vector<1x128xi32>
    %47 = arith.subi %19, %46 : vector<1x128xi32>
    %48 = arith.minsi %45, %47 : vector<1x128xi32>
    %49 = arith.sitofp %31 : vector<1x128xi32> to vector<1x128xf32>
    %50 = arith.subf %22, %49 : vector<1x128xf32>
    %cst_12 = arith.constant 0.000000e+00 : f32
    %cst_13 = arith.constant 1.000000e+00 : f32
    %51 = vector.broadcast %cst_12 : f32 to vector<1x128xf32>
    %52 = arith.maximumf %51, %50 : vector<1x128xf32>
    %53 = vector.broadcast %cst_13 : f32 to vector<1x128xf32>
    %54 = arith.minimumf %53, %52 : vector<1x128xf32>
    %55 = arith.sitofp %38 : vector<1x128xi32> to vector<1x128xf32>
    %56 = arith.subf %24, %55 : vector<1x128xf32>
    %cst_14 = arith.constant 0.000000e+00 : f32
    %cst_15 = arith.constant 1.000000e+00 : f32
    %57 = vector.broadcast %cst_14 : f32 to vector<1x128xf32>
    %58 = arith.maximumf %57, %56 : vector<1x128xf32>
    %59 = vector.broadcast %cst_15 : f32 to vector<1x128xf32>
    %60 = arith.minimumf %59, %58 : vector<1x128xf32>
    %61 = arith.index_cast %arg0 : i32 to index
    %62 = memref.load %arg2[%61] : memref<7xi32, #tpu.memory_space<smem>>
    %c128_i32 = arith.constant 128 : i32
    %63 = arith.muli %62, %c128_i32 : i32
    %64 = vector.broadcast %63 : i32 to vector<1x128xi32>
    %65 = arith.subi %20, %64 : vector<1x128xi32>
    %66 = arith.muli %31, %19 : vector<1x128xi32>
    %67 = arith.addi %65, %66 : vector<1x128xi32>
    %68 = arith.addi %67, %38 : vector<1x128xi32>
    %69 = arith.muli %31, %19 : vector<1x128xi32>
    %70 = arith.addi %65, %69 : vector<1x128xi32>
    %71 = arith.addi %70, %48 : vector<1x128xi32>
    %72 = arith.muli %43, %19 : vector<1x128xi32>
    %73 = arith.addi %65, %72 : vector<1x128xi32>
    %74 = arith.addi %73, %38 : vector<1x128xi32>
    %75 = arith.muli %43, %19 : vector<1x128xi32>
    %76 = arith.addi %65, %75 : vector<1x128xi32>
    %77 = arith.addi %76, %48 : vector<1x128xi32>
    %cst_16 = arith.constant 1.000000e+00 : f32
    %78 = vector.broadcast %cst_16 : f32 to vector<1x128xf32>
    %79 = arith.subf %78, %54 : vector<1x128xf32>
    %cst_17 = arith.constant 1.000000e+00 : f32
    %80 = vector.broadcast %cst_17 : f32 to vector<1x128xf32>
    %81 = arith.subf %80, %60 : vector<1x128xf32>
    %82 = arith.mulf %79, %81 : vector<1x128xf32>
    %cst_18 = arith.constant 1.000000e+00 : f32
    %83 = vector.broadcast %cst_18 : f32 to vector<1x128xf32>
    %84 = arith.subf %83, %54 : vector<1x128xf32>
    %85 = arith.mulf %84, %60 : vector<1x128xf32>
    %cst_19 = arith.constant 1.000000e+00 : f32
    %86 = vector.broadcast %cst_19 : f32 to vector<1x128xf32>
    %87 = arith.subf %86, %60 : vector<1x128xf32>
    %88 = arith.mulf %54, %87 : vector<1x128xf32>
    %89 = arith.mulf %54, %60 : vector<1x128xf32>
    %90 = tpu.iota {dimensions = array<i32: 0>} : vector<128x1xi32>
    %91 = vector.broadcast %90 : vector<128x1xi32> to vector<128x128xi32>
    %92 = vector.broadcast %68 : vector<1x128xi32> to vector<128x128xi32>
    %93 = arith.cmpi eq, %91, %92 : vector<128x128xi32>
    %cst_20 = arith.constant 0.000000e+00 : f32
    %94 = vector.shape_cast %82 : vector<1x128xf32> to vector<1x128xf32>
    %95 = vector.broadcast %94 : vector<1x128xf32> to vector<128x128xf32>
    %96 = vector.broadcast %cst_20 : f32 to vector<128x128xf32>
    %97 = arith.select %93, %95, %96 : vector<128x128xi1>, vector<128x128xf32>
    %98 = vector.broadcast %90 : vector<128x1xi32> to vector<128x128xi32>
    %99 = vector.broadcast %71 : vector<1x128xi32> to vector<128x128xi32>
    %100 = arith.cmpi eq, %98, %99 : vector<128x128xi32>
    %cst_21 = arith.constant 0.000000e+00 : f32
    %101 = vector.shape_cast %85 : vector<1x128xf32> to vector<1x128xf32>
    %102 = vector.broadcast %101 : vector<1x128xf32> to vector<128x128xf32>
    %103 = vector.broadcast %cst_21 : f32 to vector<128x128xf32>
    %104 = arith.select %100, %102, %103 : vector<128x128xi1>, vector<128x128xf32>
    %105 = arith.addf %97, %104 : vector<128x128xf32>
    %106 = vector.broadcast %90 : vector<128x1xi32> to vector<128x128xi32>
    %107 = vector.broadcast %74 : vector<1x128xi32> to vector<128x128xi32>
    %108 = arith.cmpi eq, %106, %107 : vector<128x128xi32>
    %cst_22 = arith.constant 0.000000e+00 : f32
    %109 = vector.shape_cast %88 : vector<1x128xf32> to vector<1x128xf32>
    %110 = vector.broadcast %109 : vector<1x128xf32> to vector<128x128xf32>
    %111 = vector.broadcast %cst_22 : f32 to vector<128x128xf32>
    %112 = arith.select %108, %110, %111 : vector<128x128xi1>, vector<128x128xf32>
    %113 = arith.addf %105, %112 : vector<128x128xf32>
    %114 = vector.broadcast %90 : vector<128x1xi32> to vector<128x128xi32>
    %115 = vector.broadcast %77 : vector<1x128xi32> to vector<128x128xi32>
    %116 = arith.cmpi eq, %114, %115 : vector<128x128xi32>
    %cst_23 = arith.constant 0.000000e+00 : f32
    %117 = vector.shape_cast %89 : vector<1x128xf32> to vector<1x128xf32>
    %118 = vector.broadcast %117 : vector<1x128xf32> to vector<128x128xf32>
    %119 = vector.broadcast %cst_23 : f32 to vector<128x128xf32>
    %120 = arith.select %116, %118, %119 : vector<128x128xi1>, vector<128x128xf32>
    %121 = arith.addf %113, %120 : vector<128x128xf32>
    %c0_24 = arith.constant 0 : index
    %c0_25 = arith.constant 0 : index
    %122 = vector.load %arg5[%c0_24, %c0_25] : memref<8x128xf32, #tpu.memory_space<vmem>>, vector<8x128xf32>
    %c0_26 = arith.constant 0 : index
    %c0_27 = arith.constant 0 : index
    %123 = vector.load %arg6[%c0_26, %c0_27] : memref<8x128xf32, #tpu.memory_space<vmem>>, vector<8x128xf32>
    %cst_28 = arith.constant dense<0.000000e+00> : vector<8x128xf32>
    %124 = tpu.matmul %122, %121, %cst_28 {dimension_numbers = #tpu.dot_dimension_numbers<[1], [0], [0], [1], [0, 0, 1, 1], [], []>} : vector<8x128xf32>, vector<128x128xf32>, vector<8x128xf32> -> vector<8x128xf32>
    %125 = arith.addf %123, %124 : vector<8x128xf32>
    %c0_29 = arith.constant 0 : index
    %c0_30 = arith.constant 0 : index
    %126 = vector.load %arg6[%c0_29, %c0_30] : memref<8x128xf32, #tpu.memory_space<vmem>>, vector<8x128xf32>
    tpu.vector_store %arg6[%c0_29, %c0_30], %125 {strides = array<i32>} : memref<8x128xf32, #tpu.memory_space<vmem>>, vector<8x128xf32>,
    return
  }
  func.func @transform_0(%arg0: i32, %arg1: memref<7xi32, #tpu.memory_space<smem>>, %arg2: memref<7xi32, #tpu.memory_space<smem>>, %arg3: memref<7xi32, #tpu.memory_space<smem>>) -> (i32, i32) {
    %0 = arith.index_cast %arg0 : i32 to index
    %1 = memref.load %arg1[%0] : memref<7xi32, #tpu.memory_space<smem>>
    %c0_i32 = arith.constant 0 : i32
    %c0_i32_0 = arith.constant 0 : i32
    return %c0_i32, %1 : i32, i32
  }
  func.func @transform_1(%arg0: i32, %arg1: memref<7xi32, #tpu.memory_space<smem>>, %arg2: memref<7xi32, #tpu.memory_space<smem>>, %arg3: memref<7xi32, #tpu.memory_space<smem>>) -> (i32, i32) {
    %0 = arith.index_cast %arg0 : i32 to index
    %1 = memref.load %arg2[%0] : memref<7xi32, #tpu.memory_space<smem>>
    %c0_i32 = arith.constant 0 : i32
    %c0_i32_0 = arith.constant 0 : i32
    return %c0_i32, %1 : i32, i32
  }
  func.func @transform_2(%arg0: i32, %arg1: memref<7xi32, #tpu.memory_space<smem>>, %arg2: memref<7xi32, #tpu.memory_space<smem>>, %arg3: memref<7xi32, #tpu.memory_space<smem>>) -> (i32, i32) {
    %0 = arith.index_cast %arg0 : i32 to index
    %1 = memref.load %arg1[%0] : memref<7xi32, #tpu.memory_space<smem>>
    %c0_i32 = arith.constant 0 : i32
    %c0_i32_0 = arith.constant 0 : i32
    return %c0_i32, %1 : i32, i32
  }
}

</mosaic_0001>

<llo_original>
// kernel: tpu_custom_call.1
$region0: #{tpu_custom_call.1}
  #allocation0 [shape = 'u32[]', space=smem, size = 0x4, offset = 0x4, fixed_abs, tag = 'smem constant byte address 0x4 - core index']
  #allocation1 [shape = 'u32[144,128]{1,0:T(1,128)}', space=vmem, size = 0x12000, scoped, tag = 'internal scratch']
  #allocation2 [shape = 's32[1]{0}', space=sflag, size = 0x4, scoped, tag = 'scoped memory for tpu_custom_call.1']
  #allocation3 [shape = 'u8[512]{0}', space=smem, size = 0x200, scoped, tag = 'prefetched SMEM operand 0']
  #allocation4 [shape = 'u8[512]{0}', space=smem, size = 0x200, scoped, tag = 'prefetched SMEM operand 1']
  #allocation5 [shape = 'u8[512]{0}', space=smem, size = 0x200, scoped, tag = 'prefetched SMEM operand 2']
  %s0 = inlined_call_operand.hbm [shape: s32[7], index: 0, kind: input, shape index: {}]
  %s1 = inlined_call_operand.vmem [shape: s32[7], index: 1, kind: input, shape index: {}]
  %s2 = inlined_call_operand.vmem [shape: s32[7], index: 2, kind: input, shape index: {}]
  %s3 = inlined_call_operand.hbm [shape: s32[8,384], index: 3, kind: input, shape index: {}]
  %s4 = inlined_call_operand.hbm [shape: f32[8,512], index: 4, kind: input, shape index: {}]
  %s5 = inlined_call_operand.hbm [shape: f32[8,384], index: 5, kind: output, shape index: {}]
  %s6 = sld [smem:[#allocation0]]
  $region53: #{tpu_custom_call.1} parent=0
    _
  %s8 = ssub.s32 1, %s6
  %s9 = scalar_select 0, %s8, %s6
  %11 = dma.hbm_to_smem %s0, 16, [#allocation3], [#allocation2]
  %s12 = sshll.u32 %s1, 4
  %s13 = int_to_ptr.vmem [resolvable:$true] %s12
  %15 = dma.vmem_to_smem %s13, 16, [#allocation4], [#allocation2]
  %s16 = sshll.u32 %s2, 4
  %s17 = int_to_ptr.vmem [resolvable:$true] %s16
  %19 = dma.vmem_to_smem %s17, 16, [#allocation5], [#allocation2]
  %20 = dma.done [#allocation2], 48
  %21 = sfence
  $region1: #{tpu_custom_call.1} parent=0
    #allocation6 [shape = 'u8[8192]{0}', space=vmem, size = 0x2000, scoped, tag = 'input window, operand 3']
    #allocation7 [shape = 's32[2]{0}', space=sflag, size = 0x8, scoped, tag = 'scoped memory for tpu_custom_call.1']
    #allocation8 [shape = 's32[2]{0}', space=sflag, size = 0x8, scoped, tag = 'scoped memory for tpu_custom_call.1']
    #allocation9 [shape = 'u8[8192]{0}', space=vmem, size = 0x2000, scoped, tag = 'input window, operand 4']
    #allocation10 [shape = 's32[2]{0}', space=sflag, size = 0x8, scoped, tag = 'scoped memory for tpu_custom_call.1']
    #allocation11 [shape = 'u8[8192]{0}', space=vmem, size = 0x2000, scoped, tag = 'output window, operand 0']
    %22 = vsyncpa [#allocation7], 0
    %s23 = scalar_lea.sflag [#allocation7], 1
    %24 = vsyncpa %s23, 0
    %25 = vsyncpa [#allocation10], 0
    %s26 = scalar_lea.sflag [#allocation10], 1
    %27 = vsyncpa %s26, 0
    %28 = vsyncpa [#allocation8], 0
    %s29 = scalar_lea.sflag [#allocation8], 1
    %30 = vsyncpa %s29, 0
    loop: start=0, step=1, limit=9
    $region2: #{tpu_custom_call.1} parent=1 // loop_pre_header
      _
    $region3: #{tpu_custom_call.1} parent=1 // loop_header
      %s32 = sphi 0, %s36
      %p33 = scmp.ge.s32.totalorder %s32, 9
      %s44 = sphi 0, %s46
      %s47 = sphi 0, %s44
      %s48 = sphi 0, %s47
      %s64 = sphi 0, %s48
      %s72 = sphi 0, %s74
      %s75 = sphi 0, %s72
      %s76 = sphi 0, %s75
      %s92 = sphi 0, %s76
      %s100 = sphi 0, %s102
      %s103 = sphi 0, %s100
      %s104 = sphi 0, %s103
      %s120 = sphi 0, %s104
    $region4: #{tpu_custom_call.1} parent=1 // loop_header_branch
      %35 = sbr.rel (%p33) target = $region8
    $region5: #{tpu_custom_call.1} parent=1 // loop_body
      %s37 = ssub.s32 %s32, 1
      %s38 = ssub.s32 %s32, 2
      %s39 = sadd.s32 %s32, 1
      %s40 = sld [smem:[#allocation3 + %s32]]
      %s41 = sld [smem:[#allocation3 + %s39]]
      %s42 = ssub.s32 %s40, %s41
      %p43 = scmp.eq.s32.totalorder %s42, 0
      %s45 = sadd.s32 %s44, 1
      %s46 = scalar_select %p43, %s44, %s45
      %p49 = pneg %p43
      %p50 = scmp.eq.s32.totalorder %s32, 6
      %p51 = por %p49, %p50
      %p52 = scmp.ne.s32.totalorder %s44, %s47
      %p53 = scmp.eq.s32.totalorder %s32, 0
      %p54 = por %p52, %p53
      %p55 = scmp.ne.s32.totalorder %s44, %s47
      %p56 = scmp.eq.s32.totalorder %s37, 6
      %p57 = por %p55, %p56
      %p58 = scmp.ne.s32.totalorder %s47, %s48
      %p59 = scmp.eq.s32.totalorder %s37, 0
      %p60 = por %p58, %p59
      %p61 = scmp.ne.s32.totalorder %s47, %s48
      %p62 = scmp.eq.s32.totalorder %s38, 6
      %p63 = por %p61, %p62
      %p65 = scmp.ne.s32.totalorder %s48, %s64
      %p66 = scmp.eq.s32.totalorder %s38, 0
      %p67 = por %p65, %p66
      %s68 = sld [smem:[#allocation4 + %s32]]
      %s69 = sld [smem:[#allocation4 + %s39]]
      %s70 = ssub.s32 %s68, %s69
      %p71 = scmp.eq.s32.totalorder %s70, 0
      %s73 = sadd.s32 %s72, 1
      %s74 = scalar_select %p71, %s72, %s73
      %p77 = pneg %p71
      %p78 = scmp.eq.s32.totalorder %s32, 6
      %p79 = por %p77, %p78
      %p80 = scmp.ne.s32.totalorder %s72, %s75
      %p81 = scmp.eq.s32.totalorder %s32, 0
      %p82 = por %p80, %p81
      %p83 = scmp.ne.s32.totalorder %s72, %s75
      %p84 = scmp.eq.s32.totalorder %s37, 6
      %p85 = por %p83, %p84
      %p86 = scmp.ne.s32.totalorder %s75, %s76
      %p87 = scmp.eq.s32.totalorder %s37, 0
      %p88 = por %p86, %p87
      %p89 = scmp.ne.s32.totalorder %s75, %s76
      %p90 = scmp.eq.s32.totalorder %s38, 6
      %p91 = por %p89, %p90
      %p93 = scmp.ne.s32.totalorder %s76, %s92
      %p94 = scmp.eq.s32.totalorder %s38, 0
      %p95 = por %p93, %p94
      %s96 = sld [smem:[#allocation3 + %s32]]
      %s97 = sld [smem:[#allocation3 + %s39]]
      %s98 = ssub.s32 %s96, %s97
      %p99 = scmp.eq.s32.totalorder %s98, 0
      %s101 = sadd.s32 %s100, 1
      %s102 = scalar_select %p99, %s100, %s101
      %p105 = pneg %p99
      %p106 = scmp.eq.s32.totalorder %s32, 6
      %p107 = por %p105, %p106
      %p108 = scmp.ne.s32.totalorder %s100, %s103
      %p109 = scmp.eq.s32.totalorder %s32, 0
      %p110 = por %p108, %p109
      %p111 = scmp.ne.s32.totalorder %s100, %s103
      %p112 = scmp.eq.s32.totalorder %s37, 6
      %p113 = por %p111, %p112
      %p114 = scmp.ne.s32.totalorder %s103, %s104
      %p115 = scmp.eq.s32.totalorder %s37, 0
      %p116 = por %p114, %p115
      %p117 = scmp.ne.s32.totalorder %s103, %s104
      %p118 = scmp.eq.s32.totalorder %s38, 6
      %p119 = por %p117, %p118
      %p121 = scmp.ne.s32.totalorder %s104, %s120
      %p122 = scmp.eq.s32.totalorder %s38, 0
      %p123 = por %p121, %p122
      %p124 = scmp.le.s32.totalorder 1, %s32
      %p125 = scmp.lt.s32.totalorder %s32, 8
      %p126 = pnand %p124, %p125
      %p127 = pneg %p126
      // Predicated region
      $region9: #{tpu_custom_call.1} parent=5 // pred_check
        _
      $region10: #{tpu_custom_call.1} parent=5 // pred_check_branch
        %129 = sbr.rel (%p126) target = $region12
      $region11: #{tpu_custom_call.1} parent=5 // pred_region
        %s130 = ssub.s32 %s32, 1
      $region12: #{tpu_custom_call.1} parent=5 // pred_fallthru
        _
      %p131 = scmp.lt.s32.totalorder %s32, 7
      // Predicated region
      $region13: #{tpu_custom_call.1} parent=5 // pred_check
        %p132 = pneg %p131
      $region14: #{tpu_custom_call.1} parent=5 // pred_check_branch
        %134 = sbr.rel (%p132) target = $region16
      $region15: #{tpu_custom_call.1} parent=5 // pred_region
        // Predicated region
        $region17: #{tpu_custom_call.1} parent=15 // pred_check
          %p135 = pneg %p54
        $region18: #{tpu_custom_call.1} parent=15 // pred_check_branch
          %137 = sbr.rel (%p135) target = $region20
        $region19: #{tpu_custom_call.1} parent=15 // pred_region
          %s138 = sand.u32 %s44, 1
          %s139 = scalar_lea.sflag [#allocation7], %s138
          %s140 = sand.u32 %s44, 1
          %s141 = smul.addr %s140, 8
          %s142 = scalar_lea.vmem [#allocation6], %s141
          %s143 = sld [smem:[#allocation3 + %s32]]
          %s145 = ssub.s32 128, 128
          %146 = vsyncadd %s139, %s145
          %s147 = smul.addr %s143, 128
          %s148 = scalar_lea.hbm %s3, %s147
          %s150 = sshll.u32 %s142, 4
          %s151 = int_to_ptr.vmem [resolvable:$true] %s150
          %153 = dma.hbm_to_vmem [thread:$0]  %s148, 128, %s151, %s139
        $region20: #{tpu_custom_call.1} parent=15 // pred_fallthru
          _
        // Predicated region
        $region21: #{tpu_custom_call.1} parent=15 // pred_check
          %p154 = pneg %p82
        $region22: #{tpu_custom_call.1} parent=15 // pred_check_branch
          %156 = sbr.rel (%p154) target = $region24
        $region23: #{tpu_custom_call.1} parent=15 // pred_region
          %s157 = sand.u32 %s72, 1
          %s158 = scalar_lea.sflag [#allocation10], %s157
          %s159 = sand.u32 %s72, 1
          %s160 = smul.addr %s159, 8
          %s161 = scalar_lea.vmem [#allocation9], %s160
          %s162 = sld [smem:[#allocation4 + %s32]]
          %s164 = ssub.s32 128, 128
          %165 = vsyncadd %s158, %s164
          %s166 = smul.addr %s162, 128
          %s167 = scalar_lea.hbm %s4, %s166
          %s169 = sshll.u32 %s161, 4
          %s170 = int_to_ptr.vmem [resolvable:$true] %s169
          %172 = dma.hbm_to_vmem [thread:$0]  %s167, 128, %s170, %s158
        $region24: #{tpu_custom_call.1} parent=15 // pred_fallthru
          _
      $region16: #{tpu_custom_call.1} parent=5 // pred_fallthru
        _
      %p173 = scmp.le.s32.totalorder 1, %s32
      %p174 = scmp.lt.s32.totalorder %s32, 8
      %p175 = pnand %p173, %p174
      %p176 = pneg %p175
      // Predicated region
      $region25: #{tpu_custom_call.1} parent=5 // pred_check
        _
      $region26: #{tpu_custom_call.1} parent=5 // pred_check_branch
        %178 = sbr.rel (%p175) target = $region28
      $region27: #{tpu_custom_call.1} parent=5 // pred_region
        %s179 = ssub.s32 %s32, 1
        %s180 = sand.u32 %s47, 1
        %s181 = scalar_lea.sflag [#allocation7], %s180
        %s182 = sand.u32 %s47, 1
        %s183 = smul.addr %s182, 8
        %s184 = scalar_lea.vmem [#allocation6], %s183
        // Predicated region
        $region29: #{tpu_custom_call.1} parent=27 // pred_check
          %p185 = pneg %p60
        $region30: #{tpu_custom_call.1} parent=27 // pred_check_branch
          %187 = sbr.rel (%p185) target = $region32
        $region31: #{tpu_custom_call.1} parent=27 // pred_region
          %188 = dma.done %s181, 128
        $region32: #{tpu_custom_call.1} parent=27 // pred_fallthru
          _
        %s189 = sand.u32 %s75, 1
        %s190 = scalar_lea.sflag [#allocation10], %s189
        %s191 = sand.u32 %s75, 1
        %s192 = smul.addr %s191, 8
        %s193 = scalar_lea.vmem [#allocation9], %s192
        // Predicated region
        $region33: #{tpu_custom_call.1} parent=27 // pred_check
          %p194 = pneg %p88
        $region34: #{tpu_custom_call.1} parent=27 // pred_check_branch
          %196 = sbr.rel (%p194) target = $region36
        $region35: #{tpu_custom_call.1} parent=27 // pred_region
          %197 = dma.done %s190, 128
        $region36: #{tpu_custom_call.1} parent=27 // pred_fallthru
          _
        %s198 = sand.u32 %s47, 1
        %s199 = scalar_lea.sflag [#allocation7], %s198
        %s200 = sand.u32 %s47, 1
        %s201 = smul.addr %s200, 8
        %s202 = scalar_lea.vmem [#allocation6], %s201
        %p203 = pneg %p60
        %p204 = pneg %p57
        %s205 = sand.u32 %s75, 1
        %s206 = scalar_lea.sflag [#allocation10], %s205
        %s207 = sand.u32 %s75, 1
        %s208 = smul.addr %s207, 8
        %s209 = scalar_lea.vmem [#allocation9], %s208
        %p210 = pneg %p88
        %p211 = pneg %p85
        %p212 = pneg %p116
        %p213 = pneg %p113
        %s214 = sand.u32 %s103, 1
        %s215 = scalar_lea.sflag [#allocation8], %s214
        %s216 = sand.u32 %s103, 1
        %s217 = smul.addr %s216, 8
        %s218 = scalar_lea.vmem [#allocation11], %s217
        %s219 = sld [smem:[#allocation3 + %s37]]
        %s220 = sld [smem:[#allocation4 + %s37]]
        %s221 = sld [smem:[#allocation3 + %s37]]
        %s222 = sld [smem:[#allocation5 + %s37]]
        %p223 = scmp.eq.s32.totalorder %s222, 1
        // Predicated region
        $region37: #{tpu_custom_call.1} parent=27 // pred_check
          %p224 = pneg %p223
        $region38: #{tpu_custom_call.1} parent=27 // pred_check_branch
          %226 = sbr.rel (%p224) target = $region40
        $region39: #{tpu_custom_call.1} parent=27 // pred_region
          %227 = vst [vmem:[%s218] sm:$0xff] 0.0
        $region40: #{tpu_custom_call.1} parent=27 // pred_fallthru
          _
        %v228 = vld [vmem:[%s184] sm:$0xff]
        %v230 = vmax.f32 %v228, 0.0
        %v231 = vmin.f32 %v230, 1.0
        %v232 = vcvt.s32.f32 %v228
        %v234 = vrot.slane %v232, 2
        %v236 = vmul.f32 %v231, %v234
        %v237 = vfloor.f32 %v236
        %v238 = vcvt.f32.s32.to.zero.pseudo %v237
        %v239 = vsub.s32 %v228, 1
        %vm240 = vcmp.gt.s32.totalorder %v238, 0
        %v241 = vsel %vm240, %v238, 0
        %v242 = vrot.slane %v241, 6
        %vm243 = vcmp.lt.s32.totalorder %v239, %v242
        %v244 = vsel %vm243, %v239, %v242
        %v245 = vadd.s32 %v244, 1
        %vm246 = vcmp.lt.s32.totalorder %v245, %v239
        %v247 = vsel %vm246, %v245, %v239
        %v248 = vcvt.s32.f32 %v244
        %v250 = vrot.slane %v248, 2
        %v252 = vsub.f32 %v236, %v250
        %v253 = vmax.f32 %v252, 0.0
        %v254 = vmin.f32 %v253, 1.0
        %s255 = sld [smem:[#allocation4 + %s37]]
        %s256 = smul.u32 %s255, 128
        %v257 = vstv %s256
        %v258 = vsub.s32 %v228, %v257
        %v259 = vrot.slane %v228, 1
        %v260 = vmul.u32 %v244, %v259
        %v261 = vrot.slane %v260, 6
        %v262 = vadd.s32 %v258, %v261
        %v263 = vrot.slane %v244, 7
        %v264 = vadd.s32 %v262, %v263
        %v265 = vrot.slane %v247, 7
        %v266 = vadd.s32 %v262, %v265
        %v267 = vmul.u32 %v247, %v259
        %v268 = vrot.slane %v267, 6
        %v269 = vadd.s32 %v258, %v268
        %v270 = vadd.s32 %v269, %v263
        %v271 = vadd.s32 %v269, %v265
        %v272 = vsub.f32 1.0, %v254
        %v274 = vrot.slane %v272, 1
        %v276 = vmul.f32 %v272, %v274
        %v278 = vrot.slane %v254, 1
        %v280 = vmul.f32 %v272, %v278
        %v281 = vmul.f32 %v254, %v274
        %v282 = vmul.f32 %v254, %v278
        %v283 = vlaneseq
        %v284 = vshrl.u32 %v283, 7
        %v285 = vadd.s32 %v284, 8
        %v286 = vadd.s32 %v284, 16
        %v287 = vadd.s32 %v284, 24
        %v288 = vadd.s32 %v284, 32
        %v289 = vadd.s32 %v284, 40
        %v290 = vadd.s32 %v284, 48
        %v291 = vadd.s32 %v284, 56
        %v292 = vadd.s32 %v284, 64
        %v293 = vadd.s32 %v284, 72
        %v294 = vadd.s32 %v284, 80
        %v295 = vadd.s32 %v284, 88
        %v296 = vadd.s32 %v284, 96
        %v297 = vadd.s32 %v284, 104
        %v298 = vadd.s32 %v284, 112
        %v299 = vadd.s32 %v284, 120
        %v300 = vlaneseq
        %v301 = vshrl.u32 %v300, 7
        %v302 = vsub.s32 4, %v301
        %v303 = vrot.slane %v264, %v302
        %vm304 = vcmp.eq.s32.totalorder %v284, %v303
        %vm305 = vcmp.eq.s32.totalorder %v285, %v303
        %vm306 = vcmp.eq.s32.totalorder %v286, %v303
        %vm307 = vcmp.eq.s32.totalorder %v287, %v303
        %vm308 = vcmp.eq.s32.totalorder %v288, %v303
        %vm309 = vcmp.eq.s32.totalorder %v289, %v303
        %vm310 = vcmp.eq.s32.totalorder %v290, %v303
        %vm311 = vcmp.eq.s32.totalorder %v291, %v303
        %vm312 = vcmp.eq.s32.totalorder %v292, %v303
        %vm313 = vcmp.eq.s32.totalorder %v293, %v303
        %vm314 = vcmp.eq.s32.totalorder %v294, %v303
        %vm315 = vcmp.eq.s32.totalorder %v295, %v303
        %vm316 = vcmp.eq.s32.totalorder %v296, %v303
        %vm317 = vcmp.eq.s32.totalorder %v297, %v303
        %vm318 = vcmp.eq.s32.totalorder %v298, %v303
        %vm319 = vcmp.eq.s32.totalorder %v299, %v303
        %v320 = vlaneseq
        %v321 = vshrl.u32 %v320, 7
        %v322 = vsub.s32 0, %v321
        %v323 = vrot.slane %v276, %v322
        %v324 = vsel %vm304, %v323, 0.0
        %v325 = vsel %vm305, %v323, 0.0
        %v326 = vsel %vm306, %v323, 0.0
        %v327 = vsel %vm307, %v323, 0.0
        %v328 = vsel %vm308, %v323, 0.0
        %v329 = vsel %vm309, %v323, 0.0
        %v330 = vsel %vm310, %v323, 0.0
        %v331 = vsel %vm311, %v323, 0.0
        %v332 = vsel %vm312, %v323, 0.0
        %v333 = vsel %vm313, %v323, 0.0
        %v334 = vsel %vm314, %v323, 0.0
        %v335 = vsel %vm315, %v323, 0.0
        %v336 = vsel %vm316, %v323, 0.0
        %v337 = vsel %vm317, %v323, 0.0
        %v338 = vsel %vm318, %v323, 0.0
        %v339 = vsel %vm319, %v323, 0.0
        %v340 = vlaneseq
        %v341 = vshrl.u32 %v340, 7
        %v342 = vsub.s32 4, %v341
        %v343 = vrot.slane %v266, %v342
        %vm344 = vcmp.eq.s32.totalorder %v284, %v343
        %vm345 = vcmp.eq.s32.totalorder %v285, %v343
        %vm346 = vcmp.eq.s32.totalorder %v286, %v343
        %vm347 = vcmp.eq.s32.totalorder %v287, %v343
        %vm348 = vcmp.eq.s32.totalorder %v288, %v343
        %vm349 = vcmp.eq.s32.totalorder %v289, %v343
        %vm350 = vcmp.eq.s32.totalorder %v290, %v343
        %vm351 = vcmp.eq.s32.totalorder %v291, %v343
        %vm352 = vcmp.eq.s32.totalorder %v292, %v343
        %vm353 = vcmp.eq.s32.totalorder %v293, %v343
        %vm354 = vcmp.eq.s32.totalorder %v294, %v343
        %vm355 = vcmp.eq.s32.totalorder %v295, %v343
        %vm356 = vcmp.eq.s32.totalorder %v296, %v343
        %vm357 = vcmp.eq.s32.totalorder %v297, %v343
        %vm358 = vcmp.eq.s32.totalorder %v298, %v343
        %vm359 = vcmp.eq.s32.totalorder %v299, %v343
        %v360 = vlaneseq
        %v361 = vshrl.u32 %v360, 7
        %v362 = vsub.s32 0, %v361
        %v363 = vrot.slane %v280, %v362
        %v364 = vsel %vm344, %v363, 0.0
        %v365 = vsel %vm345, %v363, 0.0
        %v366 = vsel %vm346, %v363, 0.0
        %v367 = vsel %vm347, %v363, 0.0
        %v368 = vsel %vm348, %v363, 0.0
        %v369 = vsel %vm349, %v363, 0.0
        %v370 = vsel %vm350, %v363, 0.0
        %v371 = vsel %vm351, %v363, 0.0
        %v372 = vsel %vm352, %v363, 0.0
        %v373 = vsel %vm353, %v363, 0.0
        %v374 = vsel %vm354, %v363, 0.0
        %v375 = vsel %vm355, %v363, 0.0
        %v376 = vsel %vm356, %v363, 0.0
        %v377 = vsel %vm357, %v363, 0.0
        %v378 = vsel %vm358, %v363, 0.0
        %v379 = vsel %vm359, %v363, 0.0
        %v380 = vadd.f32 %v324, %v364
        %v381 = vadd.f32 %v325, %v365
        %v382 = vadd.f32 %v326, %v366
        %v383 = vadd.f32 %v327, %v367
        %v384 = vadd.f32 %v328, %v368
        %v385 = vadd.f32 %v329, %v369
        %v386 = vadd.f32 %v330, %v370
        %v387 = vadd.f32 %v331, %v371
        %v388 = vadd.f32 %v332, %v372
        %v389 = vadd.f32 %v333, %v373
        %v390 = vadd.f32 %v334, %v374
        %v391 = vadd.f32 %v335, %v375
        %v392 = vadd.f32 %v336, %v376
        %v393 = vadd.f32 %v337, %v377
        %v394 = vadd.f32 %v338, %v378
        %v395 = vadd.f32 %v339, %v379
        %v396 = vlaneseq
        %v397 = vshrl.u32 %v396, 7
        %v398 = vsub.s32 4, %v397
        %v399 = vrot.slane %v270, %v398
        %vm400 = vcmp.eq.s32.totalorder %v284, %v399
        %vm401 = vcmp.eq.s32.totalorder %v285, %v399
        %vm402 = vcmp.eq.s32.totalorder %v286, %v399
        %vm403 = vcmp.eq.s32.totalorder %v287, %v399
        %vm404 = vcmp.eq.s32.totalorder %v288, %v399
        %vm405 = vcmp.eq.s32.totalorder %v289, %v399
        %vm406 = vcmp.eq.s32.totalorder %v290, %v399
        %vm407 = vcmp.eq.s32.totalorder %v291, %v399
        %vm408 = vcmp.eq.s32.totalorder %v292, %v399
        %vm409 = vcmp.eq.s32.totalorder %v293, %v399
        %vm410 = vcmp.eq.s32.totalorder %v294, %v399
        %vm411 = vcmp.eq.s32.totalorder %v295, %v399
        %vm412 = vcmp.eq.s32.totalorder %v296, %v399
        %vm413 = vcmp.eq.s32.totalorder %v297, %v399
        %vm414 = vcmp.eq.s32.totalorder %v298, %v399
        %vm415 = vcmp.eq.s32.totalorder %v299, %v399
        %v416 = vlaneseq
        %v417 = vshrl.u32 %v416, 7
        %v418 = vsub.s32 0, %v417
        %v419 = vrot.slane %v281, %v418
        %v420 = vsel %vm400, %v419, 0.0
        %v421 = vsel %vm401, %v419, 0.0
        %v422 = vsel %vm402, %v419, 0.0
        %v423 = vsel %vm403, %v419, 0.0
        %v424 = vsel %vm404, %v419, 0.0
        %v425 = vsel %vm405, %v419, 0.0
        %v426 = vsel %vm406, %v419, 0.0
        %v427 = vsel %vm407, %v419, 0.0
        %v428 = vsel %vm408, %v419, 0.0
        %v429 = vsel %vm409, %v419, 0.0
        %v430 = vsel %vm410, %v419, 0.0
        %v431 = vsel %vm411, %v419, 0.0
        %v432 = vsel %vm412, %v419, 0.0
        %v433 = vsel %vm413, %v419, 0.0
        %v434 = vsel %vm414, %v419, 0.0
        %v435 = vsel %vm415, %v419, 0.0
        %v436 = vadd.f32 %v380, %v420
        %v437 = vadd.f32 %v381, %v421
        %v438 = vadd.f32 %v382, %v422
        %v439 = vadd.f32 %v383, %v423
        %v440 = vadd.f32 %v384, %v424
        %v441 = vadd.f32 %v385, %v425
        %v442 = vadd.f32 %v386, %v426
        %v443 = vadd.f32 %v387, %v427
        %v444 = vadd.f32 %v388, %v428
        %v445 = vadd.f32 %v389, %v429
        %v446 = vadd.f32 %v390, %v430
        %v447 = vadd.f32 %v391, %v431
        %v448 = vadd.f32 %v392, %v432
        %v449 = vadd.f32 %v393, %v433
        %v450 = vadd.f32 %v394, %v434
        %v451 = vadd.f32 %v395, %v435
        %v452 = vlaneseq
        %v453 = vshrl.u32 %v452, 7
        %v454 = vsub.s32 4, %v453
        %v455 = vrot.slane %v271, %v454
        %vm456 = vcmp.eq.s32.totalorder %v284, %v455
        %vm457 = vcmp.eq.s32.totalorder %v285, %v455
        %vm458 = vcmp.eq.s32.totalorder %v286, %v455
        %vm459 = vcmp.eq.s32.totalorder %v287, %v455
        %vm460 = vcmp.eq.s32.totalorder %v288, %v455
        %vm461 = vcmp.eq.s32.totalorder %v289, %v455
        %vm462 = vcmp.eq.s32.totalorder %v290, %v455
        %vm463 = vcmp.eq.s32.totalorder %v291, %v455
        %vm464 = vcmp.eq.s32.totalorder %v292, %v455
        %vm465 = vcmp.eq.s32.totalorder %v293, %v455
        %vm466 = vcmp.eq.s32.totalorder %v294, %v455
        %vm467 = vcmp.eq.s32.totalorder %v295, %v455
        %vm468 = vcmp.eq.s32.totalorder %v296, %v455
        %vm469 = vcmp.eq.s32.totalorder %v297, %v455
        %vm470 = vcmp.eq.s32.totalorder %v298, %v455
        %vm471 = vcmp.eq.s32.totalorder %v299, %v455
        %v472 = vlaneseq
        %v473 = vshrl.u32 %v472, 7
        %v474 = vsub.s32 0, %v473
        %v475 = vrot.slane %v282, %v474
        %v476 = vsel %vm456, %v475, 0.0
        %v477 = vsel %vm457, %v475, 0.0
        %v478 = vsel %vm458, %v475, 0.0
        %v479 = vsel %vm459, %v475, 0.0
        %v480 = vsel %vm460, %v475, 0.0
        %v481 = vsel %vm461, %v475, 0.0
        %v482 = vsel %vm462, %v475, 0.0
        %v483 = vsel %vm463, %v475, 0.0
        %v484 = vsel %vm464, %v475, 0.0
        %v485 = vsel %vm465, %v475, 0.0
        %v486 = vsel %vm466, %v475, 0.0
        %v487 = vsel %vm467, %v475, 0.0
        %v488 = vsel %vm468, %v475, 0.0
        %v489 = vsel %vm469, %v475, 0.0
        %v490 = vsel %vm470, %v475, 0.0
        %v491 = vsel %vm471, %v475, 0.0
        %v492 = vadd.f32 %v436, %v476
        %v493 = vadd.f32 %v437, %v477
        %v494 = vadd.f32 %v438, %v478
        %v495 = vadd.f32 %v439, %v479
        %v496 = vadd.f32 %v440, %v480
        %v497 = vadd.f32 %v441, %v481
        %v498 = vadd.f32 %v442, %v482
        %v499 = vadd.f32 %v443, %v483
        %v500 = vadd.f32 %v444, %v484
        %v501 = vadd.f32 %v445, %v485
        %v502 = vadd.f32 %v446, %v486
        %v503 = vadd.f32 %v447, %v487
        %v504 = vadd.f32 %v448, %v488
        %v505 = vadd.f32 %v449, %v489
        %v506 = vadd.f32 %v450, %v490
        %v507 = vadd.f32 %v451, %v491
        %v508 = vld [vmem:[%s193] sm:$0xff]
        %v509 = vld [vmem:[%s218] sm:$0xff]
        %510 = vmatprep.subr.mxu0 0.0
        %511 = vmatpush1.msra.mxu0 %v507
        %512 = vmatprep.subr.mxu0 0.0
        %513 = vmatpush1.msra.mxu0 %v506
        %514 = vmatprep.subr.mxu0 0.0
        %515 = vmatpush1.msra.mxu0 %v505
        %516 = vmatprep.subr.mxu0 0.0
        %517 = vmatpush1.msra.mxu0 %v504
        %518 = vmatprep.subr.mxu0 0.0
        %519 = vmatpush1.msra.mxu0 %v503
        %520 = vmatprep.subr.mxu0 0.0
        %521 = vmatpush1.msra.mxu0 %v502
        %522 = vmatprep.subr.mxu0 0.0
        %523 = vmatpush1.msra.mxu0 %v501
        %524 = vmatprep.subr.mxu0 0.0
        %525 = vmatpush1.msra.mxu0 %v500
        %526 = vmatprep.subr.mxu0 0.0
        %527 = vmatpush1.msra.mxu0 %v499
        %528 = vmatprep.subr.mxu0 0.0
        %529 = vmatpush1.msra.mxu0 %v498
        %530 = vmatprep.subr.mxu0 0.0
        %531 = vmatpush1.msra.mxu0 %v497
        %532 = vmatprep.subr.mxu0 0.0
        %533 = vmatpush1.msra.mxu0 %v496
        %534 = vmatprep.subr.mxu0 0.0
        %535 = vmatpush1.msra.mxu0 %v495
        %536 = vmatprep.subr.mxu0 0.0
        %537 = vmatpush1.msra.mxu0 %v494
        %538 = vmatprep.subr.mxu0 0.0
        %539 = vmatpush1.msra.mxu0 %v493
        %540 = vmatprep.subr.mxu0 0.0
        %541 = vmatpush1.msra.mxu0 %v492
        %542 = vmatprep.subr.mxu0 0.0
        %543 = vmatpush2.msra.mxu0 0.0
        %544 = vmatprep.subr.mxu0 0.0
        %545 = vmatpush2.msra.mxu0 0.0
        %546 = vmatprep.subr.mxu0 0.0
        %547 = vmatpush2.msra.mxu0 0.0
        %548 = vmatprep.subr.mxu0 0.0
        %549 = vmatpush2.msra.mxu0 0.0
        %550 = vmatprep.subr.mxu0 0.0
        %551 = vmatpush2.msra.mxu0 0.0
        %552 = vmatprep.subr.mxu0 0.0
        %553 = vmatpush2.msra.mxu0 0.0
        %554 = vmatprep.subr.mxu0 0.0
        %555 = vmatpush2.msra.mxu0 0.0
        %556 = vmatprep.subr.mxu0 0.0
        %557 = vmatpush2.msra.mxu0 0.0
        %558 = vmatprep.subr.mxu0 0.0
        %559 = vmatpush2.msra.mxu0 0.0
        %560 = vmatprep.subr.mxu0 0.0
        %561 = vmatpush2.msra.mxu0 0.0
        %562 = vmatprep.subr.mxu0 0.0
        %563 = vmatpush2.msra.mxu0 0.0
        %564 = vmatprep.subr.mxu0 0.0
        %565 = vmatpush2.msra.mxu0 0.0
        %566 = vmatprep.subr.mxu0 0.0
        %567 = vmatpush2.msra.mxu0 0.0
        %568 = vmatprep.subr.mxu0 0.0
        %569 = vmatpush2.msra.mxu0 0.0
        %570 = vmatprep.subr.mxu0 0.0
        %571 = vmatpush2.msra.mxu0 0.0
        %572 = vmatprep.subr.mxu0 0.0
        %573 = vmatpush2.msra.mxu0 0.0
        %574 = vmatprep.mubr.f32.mxu0 0.0
        %575 = vmatmul.mubr.f32.gmra.mxu0 %v508
        %v576 = vpop.f32.mrf.mxu0
        %v577 = vadd.f32 0.0, %v576
        %v578 = vpop.f32.mrf.mxu0
        %579 = vdwg.mxu0
        %v580 = vadd.f32 %v509, %v577
        %581 = vst [vmem:[%s218] sm:$0xff] %v580
        %s582 = sand.u32 %s103, 1
        %s583 = scalar_lea.sflag [#allocation8], %s582
        %s584 = sand.u32 %s103, 1
        %s585 = smul.addr %s584, 8
        %s586 = scalar_lea.vmem [#allocation11], %s585
        // Predicated region
        $region41: #{tpu_custom_call.1} parent=27 // pred_check
          %p587 = pneg %p113
        $region42: #{tpu_custom_call.1} parent=27 // pred_check_branch
          %589 = sbr.rel (%p587) target = $region44
        $region43: #{tpu_custom_call.1} parent=27 // pred_region
          %s590 = sld [smem:[#allocation3 + %s37]]
          %s592 = ssub.s32 128, 128
          %593 = vsyncadd %s583, %s592
          %s594 = smul.addr %s590, 128
          %s595 = scalar_lea.hbm %s5, %s594
          %s597 = sshll.u32 %s586, 4
          %s598 = int_to_ptr.vmem [resolvable:$true] %s597
          %600 = dma.vmem_to_hbm [thread:$0]  %s598, 128, %s595, %s583
        $region44: #{tpu_custom_call.1} parent=27 // pred_fallthru
          _
      $region28: #{tpu_custom_call.1} parent=5 // pred_fallthru
        _
      %p601 = scmp.le.s32.totalorder 2, %s32
      // Predicated region
      $region45: #{tpu_custom_call.1} parent=5 // pred_check
        %p602 = pneg %p601
      $region46: #{tpu_custom_call.1} parent=5 // pred_check_branch
        %604 = sbr.rel (%p602) target = $region48
      $region47: #{tpu_custom_call.1} parent=5 // pred_region
        %s605 = ssub.s32 %s32, 2
        // Predicated region
        $region49: #{tpu_custom_call.1} parent=47 // pred_check
          %p606 = pneg %p119
        $region50: #{tpu_custom_call.1} parent=47 // pred_check_branch
          %608 = sbr.rel (%p606) target = $region52
        $region51: #{tpu_custom_call.1} parent=47 // pred_region
          %s609 = sand.u32 %s104, 1
          %s610 = scalar_lea.sflag [#allocation8], %s609
          %s611 = sand.u32 %s104, 1
          %s612 = smul.addr %s611, 8
          %s613 = scalar_lea.vmem [#allocation11], %s612
          %614 = dma.done %s610, 128
        $region52: #{tpu_custom_call.1} parent=47 // pred_fallthru
          _
      $region48: #{tpu_custom_call.1} parent=5 // pred_fallthru
        _
    $region6: #{tpu_custom_call.1} parent=1 // loop_footer
      %s36 = sadd.s32 1, %s32
    $region7: #{tpu_custom_call.1} parent=1 // loop_footer_branch
      %31 = sbr.rel target = $region3
    $region8: #{tpu_custom_call.1} parent=1 // loop_exit
      _
    %615 = vsyncpa [#allocation7], 1
    %s616 = scalar_lea.sflag [#allocation7], 1
    %617 = vsyncpa %s616, 1
    %618 = vsyncpa [#allocation10], 1
    %s619 = scalar_lea.sflag [#allocation10], 1
    %620 = vsyncpa %s619, 1
    %621 = vsyncpa [#allocation8], 1
    %s622 = scalar_lea.sflag [#allocation8], 1
    %623 = vsyncpa %s622, 1

</llo_original>
